<compile_context>
chip_gen: v7x
topology: tpu7x:2x2x1
jax: 0.10.0
libtpu: 0.0.40
codegen_flags: <defaults>
</compile_context>

<pallas_src>
import math

import jax
import jax.numpy as jnp
from jax import lax
from jax.experimental import pallas as pl
from jax.experimental.pallas import tpu as pltpu

_MIB = 1024 * 1024


# ---------------------------------------------------------------------------
# Helpers
# ---------------------------------------------------------------------------
def _round_up(x, m):
    return (x + m - 1) // m * m


def _vmem_capacity_bytes():
    try:
        return int(pltpu.get_tpu_info().vmem_capacity_bytes)
    except Exception:
        return 64 * _MIB  # conservative (v7x-sized) default


def _sublane_step(itemsize):
    # Rows per vreg: 8 for 32-bit, 16 for bf16, 32 for int8/fp8.
    return max(8, 8 * (4 // max(1, itemsize)))


def _choose_tiles(B, H, N, itemsize, target_bytes, l_pad):
    """Pick (rows TI, heads TH, batches TB) per block, aiming at ~target_bytes."""
    step = _sublane_step(itemsize)
    row_bytes = max(1, N * itemsize)
    max_rows = max(step, target_bytes // row_bytes)
    # Keep the in-kernel (TI, L) f32 Toeplitz slab under ~2 MiB.
    max_rows = min(max_rows, max(step, (2 * _MIB) // max(1, l_pad * 4)))
    ti = N if N <= max_rows else max(step, (max_rows // step) * step)
    tile_bytes = ti * N * itemsize
    th = 1
    if ti == N:
        # Whole (N, N) slab per head: aggregate heads (cap unroll at 8), then batch.
        th = int(min(H, max(1, target_bytes // max(1, tile_bytes)), 8))
    tb = int(min(B, max(1, target_bytes // max(1, th * tile_bytes))))
    return ti, th, tb


# ---------------------------------------------------------------------------
# Stage 1: relative-position MLP -> reversed, lane-dense (H, L) table
# ---------------------------------------------------------------------------
def _make_mlp_kernel(n, tp, depth, log_distance):
    def kernel(*refs):
        p_refs = refs[:-1]          # (out, in) weights and (out, 1) biases
        o_ref = refs[-1]            # (H, tp) tile of the reversed table

        base = pl.program_id(0) * tp
        k_idx = base + lax.broadcasted_iota(jnp.int32, (1, tp), 1)
        pos = float(n - 1) - k_idx.astype(jnp.float32)     # reversed positions
        if log_distance:
            pos = jnp.sign(pos) * jnp.log(jnp.abs(pos) + 1.0)

        # layer 0: Linear(1, dim) as an outer-product broadcast (VPU) + SiLU
        w0 = p_refs[0][...]         # (dim, 1)
        b0 = p_refs[1][...]         # (dim, 1)
        h = w0 * pos + b0           # (dim, tp)
        h = h * jax.nn.sigmoid(h)

        # hidden layers: Linear(dim, dim) + SiLU   (MXU, lane-major activations)
        for li in range(1, depth):
            w = p_refs[2 * li][...]
            b = p_refs[2 * li + 1][...]
            h = jnp.dot(w, h, preferred_element_type=jnp.float32) + b
            h = h * jax.nn.sigmoid(h)

        # final layer: Linear(dim, heads), no activation
        wo = p_refs[2 * depth][...]      # (H, dim)
        bo = p_refs[2 * depth + 1][...]  # (H, 1)
        o_ref[...] = jnp.dot(wo, h, preferred_element_type=jnp.float32) + bo

    return kernel


def _mlp_rev_table(weights, biases, n, l_pad, log_distance):
    depth = len(weights) - 1
    heads = weights[-1].shape[0]
    params = []
    for w, b in zip(weights, biases):
        params.append(jnp.asarray(w, jnp.float32))              # (out, in), as-is
        params.append(jnp.asarray(b, jnp.float32).reshape(-1, 1))  # (out, 1)

    tp = min(l_pad, 1024)                     # lane-tile of positions
    grid = (pl.cdiv(l_pad, tp),)
    return pl.pallas_call(
        _make_mlp_kernel(n, tp, depth, log_distance),
        out_shape=jax.ShapeDtypeStruct((heads, l_pad), jnp.float32),
        grid_spec=pltpu.PrefetchScalarGridSpec(
            num_scalar_prefetch=0,
            grid=grid,
            in_specs=[pl.BlockSpec(p.shape, lambda i: (0, 0)) for p in params],
            out_specs=pl.BlockSpec((heads, tp), lambda i: (0, i)),
        ),
        compiler_params=pltpu.CompilerParams(dimension_semantics=("arbitrary",)),
    )(*params)


# ---------------------------------------------------------------------------
# Stage 2+3 fused: streaming add with in-kernel Toeplitz bias construction
# ---------------------------------------------------------------------------
def _make_fused_kernel(n, ti, th, h_total, l_pad):
    def kernel(table_ref, qk_ref, o_ref, bias_ref):
        # Rebuild the per-(head, row-tile) bias only when the batch index resets.
        @pl.when(pl.program_id(2) == 0)
        def _build():
            i0 = pl.program_id(1) * ti
            h0 = pl.program_id(0) * th
            # jnp.roll convention: out[r, c] = x[r, (c - (shift + stride*r)) % L].
            # We want bias[r, c] = rev[(c + (n-1) - i0 - r) % L]
            #   =>  shift = i0 - (n-1), stride = 1  (validated by the probe).
            shift = (i0 - (n - 1)) % l_pad
            for hh in range(th):
                h_idx = jnp.minimum(h0 + hh, h_total - 1)     # clamp edge blocks
                row = table_ref[pl.ds(h_idx, 1), :]           # (1, L) f32
                slab = jnp.broadcast_to(row, (ti, l_pad))
                slab = pltpu.roll(slab, shift, 1, stride=1, stride_axis=0)
                bias_ref[hh] = slab[:, :n].astype(bias_ref.dtype)

        bias = bias_ref[...]                                   # (TH, TI, N)
        for bb in range(qk_ref.shape[0]):                      # static unroll over TB
            o_ref[bb] = qk_ref[bb] + bias

    return kernel


def _fused_add(qk, rev_table, *, n, ti, th, tb, vmem_limit=32 * _MIB):
    B, H = qk.shape[0], qk.shape[1]
    l_pad = rev_table.shape[1]
    grid = (pl.cdiv(H, th), pl.cdiv(n, ti), pl.cdiv(B, tb))    # batch innermost
    return pl.pallas_call(
        _make_fused_kernel(n, ti, th, H, l_pad),
        out_shape=jax.ShapeDtypeStruct(qk.shape, qk.dtype),
        grid_spec=pltpu.PrefetchScalarGridSpec(
            num_scalar_prefetch=0,
            grid=grid,
            in_specs=[
                # Tiny table: full-array block, constant index -> fetched once.
                pl.BlockSpec((H, l_pad), lambda ih, it, ib: (0, 0)),
                pl.BlockSpec((tb, th, ti, n), lambda ih, it, ib: (ib, ih, it, 0)),
            ],
            out_specs=pl.BlockSpec((tb, th, ti, n), lambda ih, it, ib: (ib, ih, it, 0)),
            scratch_shapes=[pltpu.VMEM((th, ti, n), qk.dtype)],
        ),
        compiler_params=pltpu.CompilerParams(
            dimension_semantics=("parallel", "parallel", "arbitrary"),
            vmem_limit_bytes=int(vmem_limit),
        ),
        input_output_aliases={1: 0},   # in-place over qk
    )(rev_table, qk)


# ---------------------------------------------------------------------------
# Fallback: materialized-bias streaming add (same tiling, one extra round trip)
# ---------------------------------------------------------------------------
def _plain_add_kernel(bias_ref, qk_ref, o_ref):
    bias = bias_ref[...]
    for bb in range(qk_ref.shape[0]):
        o_ref[bb] = qk_ref[bb] + bias


def _bias_add(qk, bias, *, ti, th, tb, vmem_limit=32 * _MIB):
    B, H, N, _ = qk.shape
    grid = (pl.cdiv(H, th), pl.cdiv(N, ti), pl.cdiv(B, tb))
    return pl.pallas_call(
        _plain_add_kernel,
        out_shape=jax.ShapeDtypeStruct(qk.shape, qk.dtype),
        grid_spec=pltpu.PrefetchScalarGridSpec(
            num_scalar_prefetch=0,
            grid=grid,
            in_specs=[
                pl.BlockSpec((th, ti, N), lambda ih, it, ib: (ih, it, 0)),
                pl.BlockSpec((tb, th, ti, N), lambda ih, it, ib: (ib, ih, it, 0)),
            ],
            out_specs=pl.BlockSpec((tb, th, ti, N), lambda ih, it, ib: (ib, ih, it, 0)),
        ),
        compiler_params=pltpu.CompilerParams(
            dimension_semantics=("parallel", "parallel", "arbitrary"),
            vmem_limit_bytes=int(vmem_limit),
        ),
        input_output_aliases={1: 0},
    )(bias, qk)


# ---------------------------------------------------------------------------
# One-time probe: validate the strided-roll Toeplitz construction on this chip
# ---------------------------------------------------------------------------
_ROLL_TOEPLITZ_OK = None


def _roll_toeplitz_supported():
    global _ROLL_TOEPLITZ_OK
    if _ROLL_TOEPLITZ_OK is not None:
        return _ROLL_TOEPLITZ_OK
    try:
        n, h, b = 32, 2, 2
        l_pad = _round_up(2 * n - 1, 128)
        rev = (jnp.arange(h * l_pad, dtype=jnp.float32).reshape(h, l_pad) % 61.0) - 30.0
        qk = jnp.arange(b * h * n * n, dtype=jnp.float32).reshape(b, h, n, n) % 7.0
        i = jnp.arange(n, dtype=jnp.int32)[:, None]
        j = jnp.arange(n, dtype=jnp.int32)[None, :]
        bias = jnp.take(rev, (n - 1) - i + j, axis=1)          # (h, n, n)
        expected = qk + bias[None]
        # ti=8 -> 4 row tiles (dynamic shifts), th=2 (head loop), B=2 (scratch reuse).
        out = _fused_add(jnp.copy(qk), rev, n=n, ti=8, th=2, tb=1)
        out = jax.block_until_ready(out)
        _ROLL_TOEPLITZ_OK = bool(jnp.allclose(out, expected, atol=1e-5, rtol=1e-5))
    except Exception:
        _ROLL_TOEPLITZ_OK = False
    return _ROLL_TOEPLITZ_OK


# ---------------------------------------------------------------------------
# Public wrapper
# ---------------------------------------------------------------------------
def dynamic_position_bias(qk_dots, weights, biases, *, log_distance=False):
    """weights/biases follow PyTorch nn.Linear conventions: weights[i] is (out, in)."""
    # TODO(synk): norm=True (LayerNorm inside the MLP) variant is not implemented.
    B, H, N, N2 = qk_dots.shape
    assert N == N2, "qk_dots must be square over its last two dims"
    depth = len(weights) - 1
    assert depth >= 1
    assert weights[-1].shape[0] == H, "final linear out-features must equal heads"

    l_pad = _round_up(2 * N - 1, 128)
    # Stage 1: reversed, lane-dense relative-position table (H, L), f32.
    rev = _mlp_rev_table(weights, biases, N, l_pad, log_distance)

    itemsize = jnp.dtype(qk_dots.dtype).itemsize
    cap = _vmem_capacity_bytes()
    # v7x (64 MiB VMEM, ~3.2 TB/s HBM): bigger blocks to amortize per-step overhead;
    # ~2 MiB already sits near the roofline on v5e/v6e.
    target_bytes = 4 * _MIB if cap <= 64 * _MIB else 2 * _MIB
    ti, th, tb = _choose_tiles(B, H, N, itemsize, target_bytes, l_pad)

    blk = tb * th * ti * N * itemsize
    needed = (4 * blk + th * ti * N * itemsize + 2 * H * l_pad * 4
              + 2 * ti * l_pad * 4 + 4 * _MIB)
    hard_cap = min(96 * _MIB, (3 * cap) // 4)      # <= ~48 MiB on v7x
    vmem_limit = max(32 * _MIB, min(needed, hard_cap))

    if _roll_toeplitz_supported():
        try:
            return _fused_add(qk_dots, rev, n=N, ti=ti, th=th, tb=tb,
                              vmem_limit=vmem_limit)
        except Exception:
            pass  # fall through to the materialized-bias path

    # Fallback: expand the (H, N, N) bias once (lane-axis gather, no transpose),
    # cast to the qk dtype, and stream the add.
    i = jnp.arange(N, dtype=jnp.int32)[:, None]
    j = jnp.arange(N, dtype=jnp.int32)[None, :]
    bias = jnp.take(rev[:, : 2 * N - 1], (N - 1) - i + j, axis=1)
    bias = bias.astype(qk_dots.dtype)
    return _bias_add(qk_dots, bias, ti=ti, th=th, tb=tb, vmem_limit=vmem_limit)


# ---------------------------------------------------------------------------
# Plain-JAX reference mirroring the PyTorch forward
# ---------------------------------------------------------------------------
def dpb_reference(qk_dots, weights, biases, *, log_distance=False):
    n = qk_dots.shape[-1]
    pos = jnp.arange(-n + 1, n, dtype=jnp.float32)[:, None]
    if log_distance:
        pos = jnp.sign(pos) * jnp.log(jnp.abs(pos) + 1.0)
    h = pos
    for li in range(len(weights) - 1):
        h = h @ weights[li].T + biases[li]
        h = h * jax.nn.sigmoid(h)                   # SiLU
    out = h @ weights[-1].T + biases[-1]            # (2n-1, heads)
    i = jnp.arange(n)[:, None]
    j = jnp.arange(n)[None, :]
    idx = i - j + n - 1                             # (n, n)
    bias = jnp.transpose(out[idx], (2, 0, 1))       # (heads, n, n)
    return qk_dots + bias.astype(qk_dots.dtype)


if __name__ == "__main__":
    dim, depth, heads = 32, 2, 4

    key = jax.random.PRNGKey(0)
    # PyTorch Linear shapes: weight (out, in), bias (out,).
    dims_in = [1] + [dim] * (depth - 1) + [dim]
    dims_out = [dim] * depth + [heads]
    weights, biases = [], []
    for din, dout in zip(dims_in, dims_out):
        key, kw, kb = jax.random.split(key, 3)
        bound = 1.0 / math.sqrt(din)
        weights.append(jax.random.uniform(kw, (dout, din), jnp.float32, -bound, bound))
        biases.append(jax.random.uniform(kb, (dout,), jnp.float32, -bound, bound))

    ok = True
    configs = [(2, 8, (False, True)), (2, 128, (False,))]
    for B, N, log_opts in configs:
        key, kq = jax.random.split(key)
        qk_dots = jax.random.normal(kq, (B, heads, N, N), jnp.float32)
        for log_distance in log_opts:
            out = dynamic_position_bias(jnp.copy(qk_dots), weights, biases,
                                        log_distance=log_distance)
            out = jax.block_until_ready(out)
            ref = dpb_reference(qk_dots, weights, biases, log_distance=log_distance)
            if not jnp.allclose(out, ref, atol=1e-3, rtol=1e-3):
                ok = False

    if not ok:
        raise AssertionError("Pallas kernel output mismatch vs JAX reference")
    print("KERNEL_OK")
</pallas_src>

<mosaic_0001>
module attributes {stable_mosaic.version = 11 : i64} {
  func.func @kernel(%arg0: i32, %arg1: memref<32x1xf32, #tpu.memory_space<vmem>>, %arg2: memref<32x1xf32, #tpu.memory_space<vmem>>, %arg3: memref<32x32xf32, #tpu.memory_space<vmem>>, %arg4: memref<32x1xf32, #tpu.memory_space<vmem>>, %arg5: memref<4x32xf32, #tpu.memory_space<vmem>>, %arg6: memref<4x1xf32, #tpu.memory_space<vmem>>, %arg7: memref<4x128xf32, #tpu.memory_space<vmem>>) attributes {dimension_semantics = [#tpu.dimension_semantics<arbitrary>], iteration_bounds = array<i64: 1>, scalar_prefetch = 0 : i64, scratch_operands = 0 : i64, tpu.core_type = #tpu.core_type<tc>, window_params = [{pipeline_mode = #tpu.pipeline_mode<synchronous>, transform_indices = @transform_0, window_bounds = array<i64: 32, 1>}, {pipeline_mode = #tpu.pipeline_mode<synchronous>, transform_indices = @transform_1, window_bounds = array<i64: 32, 1>}, {pipeline_mode = #tpu.pipeline_mode<synchronous>, transform_indices = @transform_2, window_bounds = array<i64: 32, 32>}, {pipeline_mode = #tpu.pipeline_mode<synchronous>, transform_indices = @transform_3, window_bounds = array<i64: 32, 1>}, {pipeline_mode = #tpu.pipeline_mode<synchronous>, transform_indices = @transform_4, window_bounds = array<i64: 4, 32>}, {pipeline_mode = #tpu.pipeline_mode<synchronous>, transform_indices = @transform_5, window_bounds = array<i64: 4, 1>}, {transform_indices = @transform_6, window_bounds = array<i64: 4, 128>}]} {
    %c128_i32 = arith.constant 128 : i32
    %0 = arith.muli %arg0, %c128_i32 : i32
    %1 = tpu.iota {dimensions = array<i32: 1>} : vector<1x128xi32>
    %2 = vector.broadcast %0 : i32 to vector<1x128xi32>
    %3 = arith.addi %2, %1 : vector<1x128xi32>
    %4 = arith.sitofp %3 : vector<1x128xi32> to vector<1x128xf32>
    %cst = arith.constant 7.000000e+00 : f32
    %5 = vector.broadcast %cst : f32 to vector<1x128xf32>
    %6 = arith.subf %5, %4 : vector<1x128xf32>
    %c0 = arith.constant 0 : index
    %c0_0 = arith.constant 0 : index
    %7 = vector.load %arg1[%c0, %c0_0] : memref<32x1xf32, #tpu.memory_space<vmem>>, vector<32x1xf32>
    %c0_1 = arith.constant 0 : index
    %c0_2 = arith.constant 0 : index
    %8 = vector.load %arg2[%c0_1, %c0_2] : memref<32x1xf32, #tpu.memory_space<vmem>>, vector<32x1xf32>
    %9 = vector.broadcast %7 : vector<32x1xf32> to vector<32x128xf32>
    %10 = vector.broadcast %6 : vector<1x128xf32> to vector<32x128xf32>
    %11 = arith.mulf %9, %10 : vector<32x128xf32>
    %12 = vector.broadcast %8 : vector<32x1xf32> to vector<32x128xf32>
    %13 = arith.addf %11, %12 : vector<32x128xf32>
    %14 = arith.negf %13 : vector<32x128xf32>
    %15 = math.exp %14 : vector<32x128xf32>
    %cst_3 = arith.constant 1.000000e+00 : f32
    %16 = vector.broadcast %cst_3 : f32 to vector<32x128xf32>
    %17 = arith.addf %16, %15 : vector<32x128xf32>
    %18 = arith.divf %16, %17 : vector<32x128xf32>
    %19 = arith.mulf %13, %18 : vector<32x128xf32>
    %c0_4 = arith.constant 0 : index
    %c0_5 = arith.constant 0 : index
    %20 = vector.load %arg3[%c0_4, %c0_5] : memref<32x32xf32, #tpu.memory_space<vmem>>, vector<32x32xf32>
    %c0_6 = arith.constant 0 : index
    %c0_7 = arith.constant 0 : index
    %21 = vector.load %arg4[%c0_6, %c0_7] : memref<32x1xf32, #tpu.memory_space<vmem>>, vector<32x1xf32>
    %cst_8 = arith.constant dense<0.000000e+00> : vector<32x128xf32>
    %22 = tpu.matmul %20, %19, %cst_8 {dimension_numbers = #tpu.dot_dimension_numbers<[1], [0], [0], [1], [0, 0, 1, 1], [], []>} : vector<32x32xf32>, vector<32x128xf32>, vector<32x128xf32> -> vector<32x128xf32>
    %23 = vector.broadcast %21 : vector<32x1xf32> to vector<32x128xf32>
    %24 = arith.addf %22, %23 : vector<32x128xf32>
    %25 = arith.negf %24 : vector<32x128xf32>
    %26 = math.exp %25 : vector<32x128xf32>
    %cst_9 = arith.constant 1.000000e+00 : f32
    %27 = vector.broadcast %cst_9 : f32 to vector<32x128xf32>
    %28 = arith.addf %27, %26 : vector<32x128xf32>
    %29 = arith.divf %27, %28 : vector<32x128xf32>
    %30 = arith.mulf %24, %29 : vector<32x128xf32>
    %c0_10 = arith.constant 0 : index
    %c0_11 = arith.constant 0 : index
    %31 = vector.load %arg5[%c0_10, %c0_11] : memref<4x32xf32, #tpu.memory_space<vmem>>, vector<4x32xf32>
    %c0_12 = arith.constant 0 : index
    %c0_13 = arith.constant 0 : index
    %32 = vector.load %arg6[%c0_12, %c0_13] : memref<4x1xf32, #tpu.memory_space<vmem>>, vector<4x1xf32>
    %cst_14 = arith.constant dense<0.000000e+00> : vector<4x128xf32>
    %33 = tpu.matmul %31, %30, %cst_14 {dimension_numbers = #tpu.dot_dimension_numbers<[1], [0], [0], [1], [0, 0, 1, 1], [], []>} : vector<4x32xf32>, vector<32x128xf32>, vector<4x128xf32> -> vector<4x128xf32>
    %34 = vector.broadcast %32 : vector<4x1xf32> to vector<4x128xf32>
    %35 = arith.addf %33, %34 : vector<4x128xf32>
    %c0_15 = arith.constant 0 : index
    %c0_16 = arith.constant 0 : index
    %36 = vector.load %arg7[%c0_15, %c0_16] : memref<4x128xf32, #tpu.memory_space<vmem>>, vector<4x128xf32>
    tpu.vector_store %arg7[%c0_15, %c0_16], %35 {strides = array<i32>} : memref<4x128xf32, #tpu.memory_space<vmem>>, vector<4x128xf32>,
    return
  }
  func.func @transform_0(%arg0: i32) -> (i32, i32) {
    %c0_i32 = arith.constant 0 : i32
    %c0_i32_0 = arith.constant 0 : i32
    %c0_i32_1 = arith.constant 0 : i32
    return %c0_i32, %c0_i32_0 : i32, i32
  }
  func.func @transform_1(%arg0: i32) -> (i32, i32) {
    %c0_i32 = arith.constant 0 : i32
    %c0_i32_0 = arith.constant 0 : i32
    %c0_i32_1 = arith.constant 0 : i32
    return %c0_i32, %c0_i32_0 : i32, i32
  }
  func.func @transform_2(%arg0: i32) -> (i32, i32) {
    %c0_i32 = arith.constant 0 : i32
    %c0_i32_0 = arith.constant 0 : i32
    %c0_i32_1 = arith.constant 0 : i32
    return %c0_i32, %c0_i32_0 : i32, i32
  }
  func.func @transform_3(%arg0: i32) -> (i32, i32) {
    %c0_i32 = arith.constant 0 : i32
    %c0_i32_0 = arith.constant 0 : i32
    %c0_i32_1 = arith.constant 0 : i32
    return %c0_i32, %c0_i32_0 : i32, i32
  }
  func.func @transform_4(%arg0: i32) -> (i32, i32) {
    %c0_i32 = arith.constant 0 : i32
    %c0_i32_0 = arith.constant 0 : i32
    %c0_i32_1 = arith.constant 0 : i32
    return %c0_i32, %c0_i32_0 : i32, i32
  }
  func.func @transform_5(%arg0: i32) -> (i32, i32) {
    %c0_i32 = arith.constant 0 : i32
    %c0_i32_0 = arith.constant 0 : i32
    %c0_i32_1 = arith.constant 0 : i32
    return %c0_i32, %c0_i32_0 : i32, i32
  }
  func.func @transform_6(%arg0: i32) -> (i32, i32) {
    %c0_i32 = arith.constant 0 : i32
    %c0_i32_0 = arith.constant 0 : i32
    return %c0_i32, %arg0 : i32, i32
  }
}

</mosaic_0001>

<llo_original>
// kernel: tpu_custom_call.1
$region0: #{tpu_custom_call.1}
  #allocation0 [shape = 'u32[]', space=smem, size = 0x4, offset = 0x4, fixed_abs, tag = 'smem constant byte address 0x4 - core index']
  #allocation1 [shape = 'u32[144,128]{1,0:T(1,128)}', space=vmem, size = 0x12000, scoped, tag = 'internal scratch']
  %s0 = inlined_call_operand.vmem [shape: f32[32,1], index: 0, kind: input, shape index: {}]
  %s1 = inlined_call_operand.vmem [shape: f32[32,1], index: 1, kind: input, shape index: {}]
  %s2 = inlined_call_operand.vmem [shape: f32[32,32], index: 2, kind: input, shape index: {}]
  %s3 = inlined_call_operand.vmem [shape: f32[32,1], index: 3, kind: input, shape index: {}]
  %s4 = inlined_call_operand.vmem [shape: f32[4,32], index: 4, kind: input, shape index: {}]
  %s5 = inlined_call_operand.vmem [shape: f32[4,1], index: 5, kind: input, shape index: {}]
  %s6 = inlined_call_operand.hbm [shape: f32[4,128], index: 6, kind: output, shape index: {}]
  %s7 = sld [smem:[#allocation0]]
  $region34: #{tpu_custom_call.1} parent=0
    _
  %s9 = ssub.s32 1, %s7
  %s10 = scalar_select 0, %s9, %s7
  $region1: #{tpu_custom_call.1} parent=0
    #allocation2 [shape = 'u8[2048]{0}', space=vmem, size = 0x800, scoped, tag = 'output window, operand 0, single buffered']
    #allocation3 [shape = 's32[1]{0}', space=sflag, size = 0x4, scoped, tag = 'scoped memory for tpu_custom_call.1']
    %11 = vsyncpa [#allocation3], 0
    // Predicated region
    $region2: #{tpu_custom_call.1} parent=1 // pred_check
      _
    $region3: #{tpu_custom_call.1} parent=1 // pred_check_branch
      %13 = sbr.rel (0) target = $region5
    $region4: #{tpu_custom_call.1} parent=1 // pred_region
      _
    $region5: #{tpu_custom_call.1} parent=1 // pred_fallthru
      _
    // Predicated region
    $region6: #{tpu_custom_call.1} parent=1 // pred_check
      _
    $region7: #{tpu_custom_call.1} parent=1 // pred_check_branch
      %15 = sbr.rel (0) target = $region9
    $region8: #{tpu_custom_call.1} parent=1 // pred_region
      _
    $region9: #{tpu_custom_call.1} parent=1 // pred_fallthru
      _
    // Predicated region
    $region10: #{tpu_custom_call.1} parent=1 // pred_check
      _
    $region11: #{tpu_custom_call.1} parent=1 // pred_check_branch
      %17 = sbr.rel (0) target = $region13
    $region12: #{tpu_custom_call.1} parent=1 // pred_region
      _
    $region13: #{tpu_custom_call.1} parent=1 // pred_fallthru
      _
    // Predicated region
    $region14: #{tpu_custom_call.1} parent=1 // pred_check
      _
    $region15: #{tpu_custom_call.1} parent=1 // pred_check_branch
      %19 = sbr.rel (0) target = $region17
    $region16: #{tpu_custom_call.1} parent=1 // pred_region
      _
    $region17: #{tpu_custom_call.1} parent=1 // pred_fallthru
      _
    // Predicated region
    $region18: #{tpu_custom_call.1} parent=1 // pred_check
      _
    $region19: #{tpu_custom_call.1} parent=1 // pred_check_branch
      %21 = sbr.rel (0) target = $region21
    $region20: #{tpu_custom_call.1} parent=1 // pred_region
      _
    $region21: #{tpu_custom_call.1} parent=1 // pred_fallthru
      _
    // Predicated region
    $region22: #{tpu_custom_call.1} parent=1 // pred_check
      _
    $region23: #{tpu_custom_call.1} parent=1 // pred_check_branch
      %23 = sbr.rel (0) target = $region25
    $region24: #{tpu_custom_call.1} parent=1 // pred_region
      _
    $region25: #{tpu_custom_call.1} parent=1 // pred_fallthru
      _
    %s24 = smul.u32 0, 128
    %v25 = vlaneseq
    %v26 = vand.u32 %v25, 127
    %v27 = vstv %s24
    %v28 = vadd.s32 %v27, %v26
    %v29 = vcvt.s32.f32 %v28
    %v30 = vsub.f32 7.0, %v29
    %v31 = vld [vmem:[%s0] sm:$0xff]
    %v32 = vld [vmem:[%s0 + $0x8] sm:$0xff]
    %v33 = vld [vmem:[%s0 + $0x10] sm:$0xff]
    %v34 = vld [vmem:[%s0 + $0x18] sm:$0xff]
    %v35 = vld [vmem:[%s1] sm:$0xff]
    %v36 = vld [vmem:[%s1 + $0x8] sm:$0xff]
    %v37 = vld [vmem:[%s1 + $0x10] sm:$0xff]
    %v38 = vld [vmem:[%s1 + $0x18] sm:$0xff]
    %40 = vset.pattern.permute.xlu0 0
    %41 = vperm.xlu0 %40, %v31
    %v42 = vpop.permute.xlu0 %41
    %45 = vset.pattern.permute.xlu0 0
    %46 = vperm.xlu0 %45, %v32
    %v47 = vpop.permute.xlu0 %46
    %50 = vset.pattern.permute.xlu0 0
    %51 = vperm.xlu0 %50, %v33
    %v52 = vpop.permute.xlu0 %51
    %55 = vset.pattern.permute.xlu0 0
    %56 = vperm.xlu0 %55, %v34
    %v57 = vpop.permute.xlu0 %56
    %v59 = vmul.f32 %v42, %v30
    %v60 = vmul.f32 %v47, %v30
    %v61 = vmul.f32 %v52, %v30
    %v62 = vmul.f32 %v57, %v30
    %64 = vset.pattern.permute.xlu0 0
    %65 = vperm.xlu0 %64, %v35
    %v66 = vpop.permute.xlu0 %65
    %69 = vset.pattern.permute.xlu0 0
    %70 = vperm.xlu0 %69, %v36
    %v71 = vpop.permute.xlu0 %70
    %74 = vset.pattern.permute.xlu0 0
    %75 = vperm.xlu0 %74, %v37
    %v76 = vpop.permute.xlu0 %75
    %79 = vset.pattern.permute.xlu0 0
    %80 = vperm.xlu0 %79, %v38
    %v81 = vpop.permute.xlu0 %80
    %v83 = vadd.f32 %v59, %v66
    %v84 = vadd.f32 %v60, %v71
    %v85 = vadd.f32 %v61, %v76
    %v86 = vadd.f32 %v62, %v81
    %v87 = vxor.u32 %v83, 2147483648
    %v88 = vxor.u32 %v84, 2147483648
    %v89 = vxor.u32 %v85, 2147483648
    %v90 = vxor.u32 %v86, 2147483648
    %v91 = vmul.f32 %v87, 1.442695
    %v92 = vpow.pop %v91
    %v93 = vmul.f32 %v88, 1.442695
    %v94 = vpow.pop %v93
    %v95 = vmul.f32 %v89, 1.442695
    %v96 = vpow.pop %v95
    %v97 = vmul.f32 %v90, 1.442695
    %v98 = vpow.pop %v97
    %v99 = vadd.f32 %v92, 1.0
    %v100 = vadd.f32 %v94, 1.0
    %v101 = vadd.f32 %v96, 1.0
    %v102 = vadd.f32 %v98, 1.0
    %v103 = vrcp.pop %v99
    %v104 = vmul.f32 1.0, %v103
    %v105 = vrcp.pop %v100
    %v106 = vmul.f32 1.0, %v105
    %v107 = vrcp.pop %v101
    %v108 = vmul.f32 1.0, %v107
    %v109 = vrcp.pop %v102
    %v110 = vmul.f32 1.0, %v109
    %v111 = vmul.f32 %v83, %v104
    %v112 = vmul.f32 %v84, %v106
    %v113 = vmul.f32 %v85, %v108
    %v114 = vmul.f32 %v86, %v110
    %v115 = vld [vmem:[%s2] sm:$0xff]
    %v116 = vld [vmem:[%s2 + $0x8] sm:$0xff]
    %v117 = vld [vmem:[%s2 + $0x10] sm:$0xff]
    %v118 = vld [vmem:[%s2 + $0x18] sm:$0xff]
    %v119 = vld [vmem:[%s3] sm:$0xff]
    %v120 = vld [vmem:[%s3 + $0x8] sm:$0xff]
    %v121 = vld [vmem:[%s3 + $0x10] sm:$0xff]
    %v122 = vld [vmem:[%s3 + $0x18] sm:$0xff]
    %124 = vset.pattern.permute.xlu0 0
    %125 = vperm.xlu0 %124, %v119
    %v126 = vpop.permute.xlu0 %125
    %129 = vset.pattern.permute.xlu0 0
    %130 = vperm.xlu0 %129, %v120
    %v131 = vpop.permute.xlu0 %130
    %134 = vset.pattern.permute.xlu0 0
    %135 = vperm.xlu0 %134, %v121
    %v136 = vpop.permute.xlu0 %135
    %139 = vset.pattern.permute.xlu0 0
    %140 = vperm.xlu0 %139, %v122
    %v141 = vpop.permute.xlu0 %140
    %vm143 = vcmask 261120
    %v145 = vsel %vm143, %v115, 0
    %v148 = vsel %vm143, %v116, 0
    %v151 = vsel %vm143, %v117, 0
    %v154 = vsel %vm143, %v118, 0
    %156 = vmatprep.subr.mxu0 0.0
    %157 = vmatpush1.msra.mxu0 %v111
    %158 = vmatprep.subr.mxu0 0.0
    %159 = vmatpush1.msra.mxu0 %v112
    %160 = vmatprep.subr.mxu0 0.0
    %161 = vmatpush1.msra.mxu0 %v113
    %162 = vmatprep.subr.mxu0 0.0
    %163 = vmatpush1.msra.mxu0 %v114
    %164 = vmatprep.subr.mxu0 0.0
    %165 = vmatpush1.msra.mxu0 0.0
    %166 = vmatprep.subr.mxu0 0.0
    %167 = vmatpush1.msra.mxu0 0.0
    %168 = vmatprep.subr.mxu0 0.0
    %169 = vmatpush1.msra.mxu0 0.0
    %170 = vmatprep.subr.mxu0 0.0
    %171 = vmatpush1.msra.mxu0 0.0
    %172 = vmatprep.subr.mxu0 0.0
    %173 = vmatpush1.msra.mxu0 0.0
    %174 = vmatprep.subr.mxu0 0.0
    %175 = vmatpush1.msra.mxu0 0.0
    %176 = vmatprep.subr.mxu0 0.0
    %177 = vmatpush1.msra.mxu0 0.0
    %178 = vmatprep.subr.mxu0 0.0
    %179 = vmatpush1.msra.mxu0 0.0
    %180 = vmatprep.subr.mxu0 0.0
    %181 = vmatpush1.msra.mxu0 0.0
    %182 = vmatprep.subr.mxu0 0.0
    %183 = vmatpush1.msra.mxu0 0.0
    %184 = vmatprep.subr.mxu0 0.0
    %185 = vmatpush1.msra.mxu0 0.0
    %186 = vmatprep.subr.mxu0 0.0
    %187 = vmatpush1.msra.mxu0 0.0
    %188 = vmatprep.subr.mxu0 0.0
    %189 = vmatpush1.msra.mxu0 0.0
    %190 = vmatprep.subr.mxu0 0.0
    %191 = vmatpush1.msra.mxu0 0.0
    %192 = vmatprep.subr.mxu0 0.0
    %193 = vmatpush1.msra.mxu0 0.0
    %194 = vmatprep.subr.mxu0 0.0
    %195 = vmatpush1.msra.mxu0 0.0
    %196 = vmatprep.subr.mxu0 0.0
    %197 = vmatpush1.msra.mxu0 0.0
    %198 = vmatprep.subr.mxu0 0.0
    %199 = vmatpush1.msra.mxu0 0.0
    %200 = vmatprep.subr.mxu0 0.0
    %201 = vmatpush1.msra.mxu0 0.0
    %202 = vmatprep.subr.mxu0 0.0
    %203 = vmatpush1.msra.mxu0 0.0
    %204 = vmatprep.subr.mxu0 0.0
    %205 = vmatpush1.msra.mxu0 0.0
    %206 = vmatprep.subr.mxu0 0.0
    %207 = vmatpush1.msra.mxu0 0.0
    %208 = vmatprep.subr.mxu0 0.0
    %209 = vmatpush1.msra.mxu0 0.0
    %210 = vmatprep.subr.mxu0 0.0
    %211 = vmatpush1.msra.mxu0 0.0
    %212 = vmatprep.subr.mxu0 0.0
    %213 = vmatpush1.msra.mxu0 0.0
    %214 = vmatprep.subr.mxu0 0.0
    %215 = vmatpush1.msra.mxu0 0.0
    %216 = vmatprep.subr.mxu0 0.0
    %217 = vmatpush1.msra.mxu0 0.0
    %218 = vmatprep.subr.mxu0 0.0
    %219 = vmatpush1.msra.mxu0 0.0
    %220 = vmatprep.mubr.f32.mxu0 0.0
    %221 = vmatmul.mubr.f32.gmra.mrb[0].mxu0 %v145
    %v222 = vpop.f32.mrb[0].mxu0
    %v223 = vadd.f32 %v126, %v222
    %v224 = vpop.f32.mrb[0].mxu0
    %225 = vmatprep.mubr.f32.mxu0 0.0
    %226 = vmatmul.mubr.f32.gmra.mrb[0].mxu0 %v148
    %v227 = vpop.f32.mrb[0].mxu0
    %v228 = vadd.f32 %v131, %v227
    %v229 = vpop.f32.mrb[0].mxu0
    %230 = vmatprep.mubr.f32.mxu0 0.0
    %231 = vmatmul.mubr.f32.gmra.mrb[0].mxu0 %v151
    %v232 = vpop.f32.mrb[0].mxu0
    %v233 = vadd.f32 %v136, %v232
    %v234 = vpop.f32.mrb[0].mxu0
    %235 = vmatprep.mubr.f32.mxu0 0.0
    %236 = vmatmul.mubr.f32.gmra.mrb[0].mxu0 %v154
    %v237 = vpop.f32.mrb[0].mxu0
    %v238 = vadd.f32 %v141, %v237
    %v239 = vpop.f32.mrb[0].mxu0
    %240 = vdwg.mxu0
    %v241 = vxor.u32 %v223, 2147483648
    %v242 = vxor.u32 %v228, 2147483648
    %v243 = vxor.u32 %v233, 2147483648
    %v244 = vxor.u32 %v238, 2147483648
    %v245 = vmul.f32 %v241, 1.442695
    %v246 = vpow.pop %v245
    %v247 = vmul.f32 %v242, 1.442695
    %v248 = vpow.pop %v247
    %v249 = vmul.f32 %v243, 1.442695
    %v250 = vpow.pop %v249
    %v251 = vmul.f32 %v244, 1.442695
    %v252 = vpow.pop %v251
    %v253 = vadd.f32 %v246, 1.0
    %v254 = vadd.f32 %v248, 1.0
    %v255 = vadd.f32 %v250, 1.0
    %v256 = vadd.f32 %v252, 1.0
    %v257 = vrcp.pop %v253
    %v258 = vmul.f32 1.0, %v257
    %v259 = vrcp.pop %v254
    %v260 = vmul.f32 1.0, %v259
    %v261 = vrcp.pop %v255
    %v262 = vmul.f32 1.0, %v261
    %v263 = vrcp.pop %v256
    %v264 = vmul.f32 1.0, %v263
    %v265 = vmul.f32 %v223, %v258
    %v266 = vmul.f32 %v228, %v260
    %v267 = vmul.f32 %v233, %v262
    %v268 = vmul.f32 %v238, %v264
    %v269 = vld [vmem:[%s4] sm:$0xf]
    %v270 = vld [vmem:[%s5] sm:$0xf]
    %272 = vset.pattern.permute.xlu0 0
    %273 = vperm.xlu0 %272, %v270
    %v274 = vpop.permute.xlu0 %273
    %v277 = vsel %vm143, %v269, 0
    %279 = vmatprep.subr.mxu0 0.0
    %280 = vmatpush1.msra.mxu0 %v265
    %281 = vmatprep.subr.mxu0 0.0
    %282 = vmatpush1.msra.mxu0 %v266
    %283 = vmatprep.subr.mxu0 0.0
    %284 = vmatpush1.msra.mxu0 %v267
    %285 = vmatprep.subr.mxu0 0.0
    %286 = vmatpush1.msra.mxu0 %v268
    %287 = vmatprep.subr.mxu0 0.0
    %288 = vmatpush1.msra.mxu0 0.0
    %289 = vmatprep.subr.mxu0 0.0
    %290 = vmatpush1.msra.mxu0 0.0
    %291 = vmatprep.subr.mxu0 0.0
    %292 = vmatpush1.msra.mxu0 0.0
    %293 = vmatprep.subr.mxu0 0.0
    %294 = vmatpush1.msra.mxu0 0.0
    %295 = vmatprep.subr.mxu0 0.0
    %296 = vmatpush1.msra.mxu0 0.0
    %297 = vmatprep.subr.mxu0 0.0
    %298 = vmatpush1.msra.mxu0 0.0
    %299 = vmatprep.subr.mxu0 0.0
    %300 = vmatpush1.msra.mxu0 0.0
    %301 = vmatprep.subr.mxu0 0.0
    %302 = vmatpush1.msra.mxu0 0.0
    %303 = vmatprep.subr.mxu0 0.0
    %304 = vmatpush1.msra.mxu0 0.0
    %305 = vmatprep.subr.mxu0 0.0
    %306 = vmatpush1.msra.mxu0 0.0
    %307 = vmatprep.subr.mxu0 0.0
    %308 = vmatpush1.msra.mxu0 0.0
    %309 = vmatprep.subr.mxu0 0.0
    %310 = vmatpush1.msra.mxu0 0.0
    %311 = vmatprep.subr.mxu0 0.0
    %312 = vmatpush1.msra.mxu0 0.0
    %313 = vmatprep.subr.mxu0 0.0
    %314 = vmatpush1.msra.mxu0 0.0
    %315 = vmatprep.subr.mxu0 0.0
    %316 = vmatpush1.msra.mxu0 0.0
    %317 = vmatprep.subr.mxu0 0.0
    %318 = vmatpush1.msra.mxu0 0.0
    %319 = vmatprep.subr.mxu0 0.0
    %320 = vmatpush1.msra.mxu0 0.0
    %321 = vmatprep.subr.mxu0 0.0
    %322 = vmatpush1.msra.mxu0 0.0
    %323 = vmatprep.subr.mxu0 0.0
    %324 = vmatpush1.msra.mxu0 0.0
    %325 = vmatprep.subr.mxu0 0.0
    %326 = vmatpush1.msra.mxu0 0.0
    %327 = vmatprep.subr.mxu0 0.0
    %328 = vmatpush1.msra.mxu0 0.0
    %329 = vmatprep.subr.mxu0 0.0
    %330 = vmatpush1.msra.mxu0 0.0
    %331 = vmatprep.subr.mxu0 0.0
    %332 = vmatpush1.msra.mxu0 0.0
    %333 = vmatprep.subr.mxu0 0.0
    %334 = vmatpush1.msra.mxu0 0.0
    %335 = vmatprep.subr.mxu0 0.0
    %336 = vmatpush1.msra.mxu0 0.0
    %337 = vmatprep.subr.mxu0 0.0
    %338 = vmatpush1.msra.mxu0 0.0
    %339 = vmatprep.subr.mxu0 0.0
    %340 = vmatpush1.msra.mxu0 0.0
    %341 = vmatprep.subr.mxu0 0.0
    %342 = vmatpush1.msra.mxu0 0.0
    %343 = vmatprep.mubr.f32.mxu0 0.0
    %344 = vmatmul.mubr.f32.gmra.mrb[0].mxu0 %v277
    %v345 = vpop.f32.mrb[0].mxu0
    %v346 = vadd.f32 %v274, %v345
    %v347 = vpop.f32.mrb[0].mxu0
    %348 = vdwg.mxu0
    %349 = vst [vmem:[#allocation2] sm:$0xf] %v346
    // Predicated region
    $region26: #{tpu_custom_call.1} parent=1 // pred_check
      _
    $region27: #{tpu_custom_call.1} parent=1 // pred_check_branch
      %351 = sbr.rel (0) target = $region29
    $region28: #{tpu_custom_call.1} parent=1 // pred_region
      %s353 = ssub.s32 64, 64
      %354 = vsyncadd [#allocation3], %s353
      %s356 = sshll.u32 [#allocation2], 4
      %s357 = int_to_ptr.vmem [resolvable:$true] %s356
      %359 = dma.vmem_to_hbm [thread:$0]  %s357, 64, %s6, [#allocation3]
    $region29: #{tpu_custom_call.1} parent=1 // pred_fallthru
      _
    // Predicated region
    $region30: #{tpu_custom_call.1} parent=1 // pred_check
      _
    $region31: #{tpu_custom_call.1} parent=1 // pred_check_branch
      %361 = sbr.rel (0) target = $region33
    $region32: #{tpu_custom_call.1} parent=1 // pred_region
      %362 = dma.done [#allocation3], 64
    $region33: #{tpu_custom_call.1} parent=1 // pred_fallthru
      _
    %363 = vsyncpa [#allocation3], 1

</llo_original>
